<compile_context>
chip_gen: v7x
topology: tpu7x:2x2x1
jax: 0.10.0
libtpu: 0.0.40
codegen_flags: <defaults>
</compile_context>

<pallas_src>
import math

import jax
import jax.numpy as jnp
from jax.experimental import pallas as pl
from jax.experimental.pallas import tpu as pltpu

_LANE = 128
_TARGET_BLOCK_BYTES = 4 * 1024 * 1024  # ~4 MiB per input block (perf review)


def _make_iou_kernel(rows_per_chunk, chunks_per_split, total_rows, needs_mask):
    """Build the per-(batch, split, chunk) kernel.

    pred_ref / target_ref : (1, rows_per_chunk, 128) VMEM tiles of the input.
    out_ref               : (1, 1, 2, 128) resident accumulator; sublane 0 is
                            sum(t*p), sublane 1 is sum(t+p), per batch/split/lane.
    """

    def kernel(pred_ref, target_ref, out_ref):
        s = pl.program_id(1)  # split index      ("parallel")
        c = pl.program_id(2)  # chunk-in-split   ("arbitrary" reduction axis)

        @pl.when(c == 0)
        def _init():
            out_ref[...] = jnp.zeros_like(out_ref)

        p = pred_ref[...].astype(jnp.float32)
        t = target_ref[...].astype(jnp.float32)

        if needs_mask:
            # Logical chunk index (NOT the clamped one used for the DMA): rows
            # at/after `total_rows` are either undefined (partial edge block)
            # or a redundant re-read of the last chunk (clamped OOB index).
            # Select them out; selects on the VPU are free under the HBM roofline.
            k = s * chunks_per_split + c
            limit = total_rows - k * rows_per_chunk
            row_id = jax.lax.broadcasted_iota(jnp.int32, p.shape, 1)
            valid = row_id < limit
            p = jnp.where(valid, p, 0.0)
            t = jnp.where(valid, t, 0.0)

        tp = jnp.sum(t * p, axis=1)  # (1, 128) partial intersection
        ts = jnp.sum(t + p, axis=1)  # (1, 128) partial sum(t) + sum(p)
        out_ref[...] += jnp.concatenate([tp, ts], axis=0)[None, None, :, :]

    return kernel


def iou_loss(pred: jax.Array, target: jax.Array, *, max_block_rows=None) -> jax.Array:
    """Pallas IoU loss. pred/target: (B, C, H, W). Returns a scalar float32."""
    assert pred.shape == target.shape
    b = pred.shape[0]
    n = math.prod(pred.shape[1:])
    assert n > 0

    itemsize = jnp.dtype(pred.dtype).itemsize
    sub = max(8, 32 // itemsize)  # sublane multiple: 8 f32 / 16 bf16 / 32 int8

    p2 = pred.reshape(b, n)
    t2 = target.reshape(b, n)

    # Minimal lane padding: only up to a multiple of 128 (<=127 zeros per row),
    # and only when required. Zeros are neutral for sum(t*p) and sum(t+p).
    # Common CNN shapes (C*H*W % 128 == 0) take the copy-free reshape path.
    n_pad = pl.cdiv(n, _LANE) * _LANE
    if n_pad != n:
        p2 = jnp.pad(p2, ((0, 0), (0, n_pad - n)))
        t2 = jnp.pad(t2, ((0, 0), (0, n_pad - n)))
    r = n_pad // _LANE
    p3 = p2.reshape(b, r, _LANE)
    t3 = t2.reshape(b, r, _LANE)

    # Block sizing: ~4 MiB per input block, rounded to the dtype sublane multiple.
    if max_block_rows is None:
        max_block_rows = _TARGET_BLOCK_BYTES // (_LANE * itemsize)
    max_block_rows = max(sub, (max_block_rows // sub) * sub)

    if r <= max_block_rows:
        rows_per_chunk = r  # one block == full reduction range (legal block dim)
        num_chunks = 1
    else:
        rows_per_chunk = max_block_rows
        num_chunks = pl.cdiv(r, rows_per_chunk)

    # 2-way split of the reduction range -> both v7x TensorCores busy for any B.
    nsplit = 2 if num_chunks >= 2 else 1
    chunks_per_split = pl.cdiv(num_chunks, nsplit)
    needs_mask = nsplit * chunks_per_split * rows_per_chunk > r

    kernel = _make_iou_kernel(rows_per_chunk, chunks_per_split, r, needs_mask)

    def in_map(i, s, c):
        # Clamp so the DMA always targets an in-bounds chunk; redundant reads of
        # the last chunk (when num_chunks % nsplit != 0) are zeroed by the mask.
        k = jnp.minimum(s * chunks_per_split + c, num_chunks - 1)
        return (i, k, 0)

    out = pl.pallas_call(
        kernel,
        out_shape=jax.ShapeDtypeStruct((b, nsplit, 2, _LANE), jnp.float32),
        grid_spec=pltpu.PrefetchScalarGridSpec(
            num_scalar_prefetch=0,
            grid=(b, nsplit, chunks_per_split),
            in_specs=[
                pl.BlockSpec((1, rows_per_chunk, _LANE), in_map),
                pl.BlockSpec((1, rows_per_chunk, _LANE), in_map),
            ],
            out_specs=pl.BlockSpec((1, 1, 2, _LANE), lambda i, s, c: (i, s, 0, 0)),
        ),
        compiler_params=pltpu.CompilerParams(
            # batch and split axes independent -> parallel (megacore sharding);
            # chunk axis accumulates into the resident output block -> arbitrary.
            dimension_semantics=("parallel", "parallel", "arbitrary"),
            vmem_limit_bytes=32 * 1024 * 1024,
        ),
    )(p3, t3)

    # Finalize in the JAX wrapper: lane/split reduce, union, divide, batch sum.
    iand = jnp.sum(out[:, :, 0, :], axis=(1, 2))  # (B,) sum(t * p)
    tot = jnp.sum(out[:, :, 1, :], axis=(1, 2))   # (B,) sum(t) + sum(p)
    ior = tot - iand                              # union (NaN if 0, as in reference)
    loss = jnp.sum(1.0 - iand / ior)
    return loss


def _iou_loss_ref(pred, target):
    """Pure-JAX reference mirroring the PyTorch loop."""
    b = pred.shape[0]
    loss = jnp.float32(0.0)
    for i in range(b):
        iand = jnp.sum(target[i] * pred[i])
        ior = jnp.sum(target[i]) + jnp.sum(pred[i]) - iand
        loss = loss + (1.0 - iand / ior)
    return loss


if __name__ == "__main__":
    key = jax.random.PRNGKey(0)

    def run_case(shape, case_key, **kw):
        kp, kt = jax.random.split(case_key)
        pred = jax.nn.sigmoid(jax.random.normal(kp, shape, dtype=jnp.float32))
        target = (jax.random.uniform(kt, shape, dtype=jnp.float32) > 0.5).astype(
            jnp.float32
        )
        out = jax.block_until_ready(iou_loss(pred, target, **kw))
        ref = _iou_loss_ref(pred, target)
        assert jnp.allclose(out, ref, rtol=1e-5, atol=1e-5), (shape, out, ref)

    k1, k2, k3, key = jax.random.split(key, 4)
    # Case 1: lane-aligned (C*H*W % 128 == 0) -> copy-free reshape, single chunk.
    run_case((2, 4, 16, 16), k1)
    # Case 2: non-128-divisible spatial size -> exercises the minimal-pad path.
    run_case((2, 3, 7, 9), k2)
    # Case 3: force multi-chunk + 2-way split + odd chunk count + partial last
    # chunk -> exercises the clamp + in-kernel row mask paths with small data.
    run_case((2, 4, 24, 24), k3, max_block_rows=8)

    print("KERNEL_OK")
</pallas_src>

<mosaic_0001>
module attributes {stable_mosaic.version = 11 : i64} {
  func.func @kernel(%arg0: i32, %arg1: i32, %arg2: i32, %arg3: memref<1x8x128xf32, #tpu.memory_space<vmem>>, %arg4: memref<1x8x128xf32, #tpu.memory_space<vmem>>, %arg5: memref<1x1x2x128xf32, #tpu.memory_space<vmem>>) attributes {dimension_semantics = [#tpu.dimension_semantics<parallel>, #tpu.dimension_semantics<parallel>, #tpu.dimension_semantics<arbitrary>], iteration_bounds = array<i64: 2, 1, 1>, scalar_prefetch = 0 : i64, scratch_operands = 0 : i64, tpu.core_type = #tpu.core_type<tc>, window_params = [{transform_indices = @transform_0, window_bounds = array<i64: 1, 8, 128>}, {transform_indices = @transform_1, window_bounds = array<i64: 1, 8, 128>}, {transform_indices = @transform_2, window_bounds = array<i64: 1, 1, 2, 128>}]} {
    %c0_i32 = arith.constant 0 : i32
    %0 = arith.cmpi eq, %arg2, %c0_i32 : i32
    %1 = arith.extui %0 : i1 to i32
    %c0_i32_0 = arith.constant 0 : i32
    %2 = arith.cmpi ne, %1, %c0_i32_0 : i32
    scf.if %2 {
      %cst_15 = arith.constant 0.000000e+00 : f32
      %14 = vector.broadcast %cst_15 : f32 to vector<1x1x2x128xf32>
      %c0_16 = arith.constant 0 : index
      %c0_17 = arith.constant 0 : index
      %c0_18 = arith.constant 0 : index
      %c0_19 = arith.constant 0 : index
      %15 = vector.load %arg5[%c0_16, %c0_17, %c0_18, %c0_19] : memref<1x1x2x128xf32, #tpu.memory_space<vmem>>, vector<1x1x2x128xf32>
      tpu.vector_store %arg5[%c0_16, %c0_17, %c0_18, %c0_19], %14 {strides = array<i32>} : memref<1x1x2x128xf32, #tpu.memory_space<vmem>>, vector<1x1x2x128xf32>,
    } else {
    }
    %c0 = arith.constant 0 : index
    %c0_1 = arith.constant 0 : index
    %c0_2 = arith.constant 0 : index
    %3 = vector.load %arg3[%c0, %c0_1, %c0_2] : memref<1x8x128xf32, #tpu.memory_space<vmem>>, vector<1x8x128xf32>
    %c0_3 = arith.constant 0 : index
    %c0_4 = arith.constant 0 : index
    %c0_5 = arith.constant 0 : index
    %4 = vector.load %arg4[%c0_3, %c0_4, %c0_5] : memref<1x8x128xf32, #tpu.memory_space<vmem>>, vector<1x8x128xf32>
    %5 = arith.mulf %4, %3 : vector<1x8x128xf32>
    %cst = arith.constant dense<0.000000e+00> : vector<1x128xf32>
    %6 = vector.multi_reduction <add>, %5, %cst [1] : vector<1x8x128xf32> to vector<1x128xf32>
    %7 = arith.addf %4, %3 : vector<1x8x128xf32>
    %cst_6 = arith.constant dense<0.000000e+00> : vector<1x128xf32>
    %8 = vector.multi_reduction <add>, %7, %cst_6 [1] : vector<1x8x128xf32> to vector<1x128xf32>
    %c0_7 = arith.constant 0 : index
    %c0_8 = arith.constant 0 : index
    %c0_9 = arith.constant 0 : index
    %c0_10 = arith.constant 0 : index
    %9 = vector.load %arg5[%c0_7, %c0_8, %c0_9, %c0_10] : memref<1x1x2x128xf32, #tpu.memory_space<vmem>>, vector<1x1x2x128xf32>
    %10 = tpu.concatenate %6, %8 in 0 : vector<1x128xf32>, vector<1x128xf32> -> vector<2x128xf32>
    %11 = vector.shape_cast %10 : vector<2x128xf32> to vector<1x1x2x128xf32>
    %12 = arith.addf %9, %11 : vector<1x1x2x128xf32>
    %c0_11 = arith.constant 0 : index
    %c0_12 = arith.constant 0 : index
    %c0_13 = arith.constant 0 : index
    %c0_14 = arith.constant 0 : index
    %13 = vector.load %arg5[%c0_11, %c0_12, %c0_13, %c0_14] : memref<1x1x2x128xf32, #tpu.memory_space<vmem>>, vector<1x1x2x128xf32>
    tpu.vector_store %arg5[%c0_11, %c0_12, %c0_13, %c0_14], %12 {strides = array<i32>} : memref<1x1x2x128xf32, #tpu.memory_space<vmem>>, vector<1x1x2x128xf32>,
    return
  }
  func.func @transform_0(%arg0: i32, %arg1: i32, %arg2: i32) -> (i32, i32, i32) {
    %c1_i32 = arith.constant 1 : i32
    %0 = arith.muli %arg1, %c1_i32 : i32
    %1 = arith.addi %0, %arg2 : i32
    %c0_i32 = arith.constant 0 : i32
    %2 = arith.minsi %1, %c0_i32 : i32
    %c0_i32_0 = arith.constant 0 : i32
    %c0_i32_1 = arith.constant 0 : i32
    return %arg0, %2, %c0_i32_0 : i32, i32, i32
  }
  func.func @transform_1(%arg0: i32, %arg1: i32, %arg2: i32) -> (i32, i32, i32) {
    %c1_i32 = arith.constant 1 : i32
    %0 = arith.muli %arg1, %c1_i32 : i32
    %1 = arith.addi %0, %arg2 : i32
    %c0_i32 = arith.constant 0 : i32
    %2 = arith.minsi %1, %c0_i32 : i32
    %c0_i32_0 = arith.constant 0 : i32
    %c0_i32_1 = arith.constant 0 : i32
    return %arg0, %2, %c0_i32_0 : i32, i32, i32
  }
  func.func @transform_2(%arg0: i32, %arg1: i32, %arg2: i32) -> (i32, i32, i32, i32) {
    %c0_i32 = arith.constant 0 : i32
    %c0_i32_0 = arith.constant 0 : i32
    %c0_i32_1 = arith.constant 0 : i32
    return %arg0, %arg1, %c0_i32, %c0_i32_0 : i32, i32, i32, i32
  }
}

</mosaic_0001>

<llo_original>
// kernel: tpu_custom_call.1
$region0: #{tpu_custom_call.1}
  #allocation0 [shape = 'u32[]', space=smem, size = 0x4, offset = 0x4, fixed_abs, tag = 'smem constant byte address 0x4 - core index']
  #allocation1 [shape = 'u32[144,128]{1,0:T(1,128)}', space=vmem, size = 0x12000, scoped, tag = 'internal scratch']
  %s0 = inlined_call_operand.hbm [shape: f32[2,8,128], index: 0, kind: input, shape index: {}]
  %s1 = inlined_call_operand.hbm [shape: f32[2,8,128], index: 1, kind: input, shape index: {}]
  %s2 = inlined_call_operand.hbm [shape: f32[2,1,2,128], index: 2, kind: output, shape index: {}]
  %s3 = sld [smem:[#allocation0]]
  $region53: #{tpu_custom_call.1} parent=0
    _
  %s5 = ssub.s32 1, %s3
  %s6 = scalar_select 0, %s5, %s3
  $region1: #{tpu_custom_call.1} parent=0
    #allocation2 [shape = 'u8[8192]{0}', space=vmem, size = 0x2000, scoped, tag = 'input window, operand 0']
    #allocation3 [shape = 's32[2]{0}', space=sflag, size = 0x8, scoped, tag = 'scoped memory for tpu_custom_call.1']
    #allocation4 [shape = 's32[2]{0}', space=sflag, size = 0x8, scoped, tag = 'scoped memory for tpu_custom_call.1']
    #allocation5 [shape = 'u8[8192]{0}', space=vmem, size = 0x2000, scoped, tag = 'input window, operand 1']
    #allocation6 [shape = 's32[2]{0}', space=sflag, size = 0x8, scoped, tag = 'scoped memory for tpu_custom_call.1']
    #allocation7 [shape = 'u8[2048]{0}', space=vmem, size = 0x800, scoped, tag = 'output window, operand 0']
    %7 = vsyncpa [#allocation3], 0
    %s8 = scalar_lea.sflag [#allocation3], 1
    %9 = vsyncpa %s8, 0
    %10 = vsyncpa [#allocation6], 0
    %s11 = scalar_lea.sflag [#allocation6], 1
    %12 = vsyncpa %s11, 0
    %13 = vsyncpa [#allocation4], 0
    %s14 = scalar_lea.sflag [#allocation4], 1
    %15 = vsyncpa %s14, 0
    loop: start=0, step=1, limit=4
    $region2: #{tpu_custom_call.1} parent=1 // loop_pre_header
      _
    $region3: #{tpu_custom_call.1} parent=1 // loop_header
      %s17 = sphi 0, %s21
      %p18 = scmp.ge.s32.totalorder %s17, 4
      %s24 = sphi 0, %s43
      %s25 = sphi 0, %s39
      %s26 = sphi 0, %s35
      %s27 = sphi 0, %s24
      %s28 = sphi 0, %s25
      %s29 = sphi 0, %s26
      %s30 = sphi 0, %s27
      %s31 = sphi 0, %s28
      %s32 = sphi 0, %s29
      %s54 = sphi 0, %s56
      %s57 = sphi 0, %s54
      %s58 = sphi 0, %s57
      %s74 = sphi 0, %s58
      %s88 = sphi 0, %s90
      %s91 = sphi 0, %s88
      %s92 = sphi 0, %s91
      %s108 = sphi 0, %s92
      %s116 = sphi 0, %s118
      %s119 = sphi 0, %s116
      %s120 = sphi 0, %s119
      %s136 = sphi 0, %s120
    $region4: #{tpu_custom_call.1} parent=1 // loop_header_branch
      %20 = sbr.rel (%p18) target = $region8
    $region5: #{tpu_custom_call.1} parent=1 // loop_body
      %s22 = ssub.s32 %s17, 1
      %s23 = ssub.s32 %s17, 2
      %s33 = sadd.s32 1, %s26
      %p34 = scmp.ge.s32.totalorder %s33, 1
      %s35 = scalar_select %p34, 0, %s33
      %s36 = sadd.s32 1, %s25
      %s37 = scalar_select %p34, %s36, %s25
      %p38 = scmp.ge.s32.totalorder %s37, 1
      %s39 = scalar_select %p38, 0, %s37
      %s40 = sadd.s32 1, %s24
      %s41 = scalar_select %p38, %s40, %s24
      %p42 = scmp.ge.s32.totalorder %s41, 2
      %s43 = scalar_select %p42, 0, %s41
      %s44 = sadd.s32 %s25, %s26
      %p45 = scmp.lt.s32.totalorder %s44, 0
      %s46 = scalar_select %p45, %s44, 0
      %s47 = sadd.s32 %s39, %s35
      %p48 = scmp.lt.s32.totalorder %s47, 0
      %s49 = scalar_select %p48, %s47, 0
      %s50 = ssub.s32 %s24, %s43
      %s51 = ssub.s32 %s46, %s49
      %s52 = sor.u32 %s50, %s51
      %p53 = scmp.eq.s32.totalorder %s52, 0
      %s55 = sadd.s32 %s54, 1
      %s56 = scalar_select %p53, %s54, %s55
      %p59 = pneg %p53
      %p60 = scmp.eq.s32.totalorder %s17, 1
      %p61 = por %p59, %p60
      %p62 = scmp.ne.s32.totalorder %s54, %s57
      %p63 = scmp.eq.s32.totalorder %s17, 0
      %p64 = por %p62, %p63
      %p65 = scmp.ne.s32.totalorder %s54, %s57
      %p66 = scmp.eq.s32.totalorder %s22, 1
      %p67 = por %p65, %p66
      %p68 = scmp.ne.s32.totalorder %s57, %s58
      %p69 = scmp.eq.s32.totalorder %s22, 0
      %p70 = por %p68, %p69
      %p71 = scmp.ne.s32.totalorder %s57, %s58
      %p72 = scmp.eq.s32.totalorder %s23, 1
      %p73 = por %p71, %p72
      %p75 = scmp.ne.s32.totalorder %s58, %s74
      %p76 = scmp.eq.s32.totalorder %s23, 0
      %p77 = por %p75, %p76
      %s78 = sadd.s32 %s25, %s26
      %p79 = scmp.lt.s32.totalorder %s78, 0
      %s80 = scalar_select %p79, %s78, 0
      %s81 = sadd.s32 %s39, %s35
      %p82 = scmp.lt.s32.totalorder %s81, 0
      %s83 = scalar_select %p82, %s81, 0
      %s84 = ssub.s32 %s24, %s43
      %s85 = ssub.s32 %s80, %s83
      %s86 = sor.u32 %s84, %s85
      %p87 = scmp.eq.s32.totalorder %s86, 0
      %s89 = sadd.s32 %s88, 1
      %s90 = scalar_select %p87, %s88, %s89
      %p93 = pneg %p87
      %p94 = scmp.eq.s32.totalorder %s17, 1
      %p95 = por %p93, %p94
      %p96 = scmp.ne.s32.totalorder %s88, %s91
      %p97 = scmp.eq.s32.totalorder %s17, 0
      %p98 = por %p96, %p97
      %p99 = scmp.ne.s32.totalorder %s88, %s91
      %p100 = scmp.eq.s32.totalorder %s22, 1
      %p101 = por %p99, %p100
      %p102 = scmp.ne.s32.totalorder %s91, %s92
      %p103 = scmp.eq.s32.totalorder %s22, 0
      %p104 = por %p102, %p103
      %p105 = scmp.ne.s32.totalorder %s91, %s92
      %p106 = scmp.eq.s32.totalorder %s23, 1
      %p107 = por %p105, %p106
      %p109 = scmp.ne.s32.totalorder %s92, %s108
      %p110 = scmp.eq.s32.totalorder %s23, 0
      %p111 = por %p109, %p110
      %s112 = ssub.s32 %s24, %s43
      %s113 = ssub.s32 %s25, %s39
      %s114 = sor.u32 %s112, %s113
      %p115 = scmp.eq.s32.totalorder %s114, 0
      %s117 = sadd.s32 %s116, 1
      %s118 = scalar_select %p115, %s116, %s117
      %p121 = pneg %p115
      %p122 = scmp.eq.s32.totalorder %s17, 1
      %p123 = por %p121, %p122
      %p124 = scmp.ne.s32.totalorder %s116, %s119
      %p125 = scmp.eq.s32.totalorder %s17, 0
      %p126 = por %p124, %p125
      %p127 = scmp.ne.s32.totalorder %s116, %s119
      %p128 = scmp.eq.s32.totalorder %s22, 1
      %p129 = por %p127, %p128
      %p130 = scmp.ne.s32.totalorder %s119, %s120
      %p131 = scmp.eq.s32.totalorder %s22, 0
      %p132 = por %p130, %p131
      %p133 = scmp.ne.s32.totalorder %s119, %s120
      %p134 = scmp.eq.s32.totalorder %s23, 1
      %p135 = por %p133, %p134
      %p137 = scmp.ne.s32.totalorder %s120, %s136
      %p138 = scmp.eq.s32.totalorder %s23, 0
      %p139 = por %p137, %p138
      %p140 = scmp.le.s32.totalorder 1, %s17
      %p141 = scmp.lt.s32.totalorder %s17, 3
      %p142 = pnand %p140, %p141
      %p143 = pneg %p142
      // Predicated region
      $region9: #{tpu_custom_call.1} parent=5 // pred_check
        _
      $region10: #{tpu_custom_call.1} parent=5 // pred_check_branch
        %145 = sbr.rel (%p142) target = $region12
      $region11: #{tpu_custom_call.1} parent=5 // pred_region
        %s146 = ssub.s32 %s17, 1
      $region12: #{tpu_custom_call.1} parent=5 // pred_fallthru
        _
      %p147 = scmp.lt.s32.totalorder %s17, 2
      // Predicated region
      $region13: #{tpu_custom_call.1} parent=5 // pred_check
        %p148 = pneg %p147
      $region14: #{tpu_custom_call.1} parent=5 // pred_check_branch
        %150 = sbr.rel (%p148) target = $region16
      $region15: #{tpu_custom_call.1} parent=5 // pred_region
        // Predicated region
        $region17: #{tpu_custom_call.1} parent=15 // pred_check
          %p151 = pneg %p64
        $region18: #{tpu_custom_call.1} parent=15 // pred_check_branch
          %153 = sbr.rel (%p151) target = $region20
        $region19: #{tpu_custom_call.1} parent=15 // pred_region
          %s154 = sand.u32 %s54, 1
          %s155 = scalar_lea.sflag [#allocation3], %s154
          %s156 = sand.u32 %s54, 1
          %s157 = smul.addr %s156, 8
          %s158 = scalar_lea.vmem [#allocation2], %s157
          %s159 = sadd.s32 %s25, %s26
          %p160 = scmp.lt.s32.totalorder %s159, 0
          %s161 = scalar_select %p160, %s159, 0
          %s163 = ssub.s32 128, 128
          %164 = vsyncadd %s155, %s163
          %s165 = sadd.s32 %s161, %s24
          %s166 = smul.addr %s165, 128
          %s167 = scalar_lea.hbm %s0, %s166
          %s169 = sshll.u32 %s158, 4
          %s170 = int_to_ptr.vmem [resolvable:$true] %s169
          %172 = dma.hbm_to_vmem [thread:$0]  %s167, 128, %s170, %s155
        $region20: #{tpu_custom_call.1} parent=15 // pred_fallthru
          _
        // Predicated region
        $region21: #{tpu_custom_call.1} parent=15 // pred_check
          %p173 = pneg %p98
        $region22: #{tpu_custom_call.1} parent=15 // pred_check_branch
          %175 = sbr.rel (%p173) target = $region24
        $region23: #{tpu_custom_call.1} parent=15 // pred_region
          %s176 = sand.u32 %s88, 1
          %s177 = scalar_lea.sflag [#allocation6], %s176
          %s178 = sand.u32 %s88, 1
          %s179 = smul.addr %s178, 8
          %s180 = scalar_lea.vmem [#allocation5], %s179
          %s181 = sadd.s32 %s25, %s26
          %p182 = scmp.lt.s32.totalorder %s181, 0
          %s183 = scalar_select %p182, %s181, 0
          %s185 = ssub.s32 128, 128
          %186 = vsyncadd %s177, %s185
          %s187 = sadd.s32 %s183, %s24
          %s188 = smul.addr %s187, 128
          %s189 = scalar_lea.hbm %s1, %s188
          %s191 = sshll.u32 %s180, 4
          %s192 = int_to_ptr.vmem [resolvable:$true] %s191
          %194 = dma.hbm_to_vmem [thread:$0]  %s189, 128, %s192, %s177
        $region24: #{tpu_custom_call.1} parent=15 // pred_fallthru
          _
      $region16: #{tpu_custom_call.1} parent=5 // pred_fallthru
        _
      %p195 = scmp.le.s32.totalorder 1, %s17
      %p196 = scmp.lt.s32.totalorder %s17, 3
      %p197 = pnand %p195, %p196
      %p198 = pneg %p197
      // Predicated region
      $region25: #{tpu_custom_call.1} parent=5 // pred_check
        _
      $region26: #{tpu_custom_call.1} parent=5 // pred_check_branch
        %200 = sbr.rel (%p197) target = $region28
      $region27: #{tpu_custom_call.1} parent=5 // pred_region
        %s201 = ssub.s32 %s17, 1
        %s202 = sand.u32 %s57, 1
        %s203 = scalar_lea.sflag [#allocation3], %s202
        %s204 = sand.u32 %s57, 1
        %s205 = smul.addr %s204, 8
        %s206 = scalar_lea.vmem [#allocation2], %s205
        // Predicated region
        $region29: #{tpu_custom_call.1} parent=27 // pred_check
          %p207 = pneg %p70
        $region30: #{tpu_custom_call.1} parent=27 // pred_check_branch
          %209 = sbr.rel (%p207) target = $region32
        $region31: #{tpu_custom_call.1} parent=27 // pred_region
          %210 = dma.done %s203, 128
        $region32: #{tpu_custom_call.1} parent=27 // pred_fallthru
          _
        %s211 = sand.u32 %s91, 1
        %s212 = scalar_lea.sflag [#allocation6], %s211
        %s213 = sand.u32 %s91, 1
        %s214 = smul.addr %s213, 8
        %s215 = scalar_lea.vmem [#allocation5], %s214
        // Predicated region
        $region33: #{tpu_custom_call.1} parent=27 // pred_check
          %p216 = pneg %p104
        $region34: #{tpu_custom_call.1} parent=27 // pred_check_branch
          %218 = sbr.rel (%p216) target = $region36
        $region35: #{tpu_custom_call.1} parent=27 // pred_region
          %219 = dma.done %s212, 128
        $region36: #{tpu_custom_call.1} parent=27 // pred_fallthru
          _
        %s220 = sand.u32 %s57, 1
        %s221 = scalar_lea.sflag [#allocation3], %s220
        %s222 = sand.u32 %s57, 1
        %s223 = smul.addr %s222, 8
        %s224 = scalar_lea.vmem [#allocation2], %s223
        %p225 = pneg %p70
        %p226 = pneg %p67
        %s227 = sand.u32 %s91, 1
        %s228 = scalar_lea.sflag [#allocation6], %s227
        %s229 = sand.u32 %s91, 1
        %s230 = smul.addr %s229, 8
        %s231 = scalar_lea.vmem [#allocation5], %s230
        %p232 = pneg %p104
        %p233 = pneg %p101
        %p234 = pneg %p132
        %p235 = pneg %p129
        %s236 = sand.u32 %s119, 1
        %s237 = scalar_lea.sflag [#allocation4], %s236
        %s238 = sand.u32 %s119, 1
        %s239 = smul.addr %s238, 2
        %s240 = scalar_lea.vmem [#allocation7], %s239
        %s241 = sadd.s32 %s28, %s29
        %p242 = scmp.lt.s32.totalorder %s241, 0
        %s243 = scalar_select %p242, %s241, 0
        %s244 = sadd.s32 %s28, %s29
        %p245 = scmp.lt.s32.totalorder %s244, 0
        %s246 = scalar_select %p245, %s244, 0
        %p247 = scmp.eq.s32.totalorder %s29, 0
        // Predicated region
        $region37: #{tpu_custom_call.1} parent=27 // pred_check
          %p248 = pneg %p247
        $region38: #{tpu_custom_call.1} parent=27 // pred_check_branch
          %250 = sbr.rel (%p248) target = $region40
        $region39: #{tpu_custom_call.1} parent=27 // pred_region
          %251 = vst [vmem:[%s240] sm:$0x3] 0.0
        $region40: #{tpu_custom_call.1} parent=27 // pred_fallthru
          _
        %v252 = vld [vmem:[%s206] sm:$0xff]
        %v253 = vld [vmem:[%s215] sm:$0xff]
        %v254 = vmul.f32 %v253, %v252
        %v255 = vrot.slane %v254, 4
        %v256 = vadd.f32 %v254, %v255
        %v257 = vrot.slane %v256, 2
        %v258 = vadd.f32 %v256, %v257
        %v259 = vrot.slane %v258, 1
        %v260 = vadd.f32 %v258, %v259
        %v261 = vadd.f32 %v253, %v252
        %v262 = vrot.slane %v261, 4
        %v263 = vadd.f32 %v261, %v262
        %v264 = vrot.slane %v263, 2
        %v265 = vadd.f32 %v263, %v264
        %v266 = vrot.slane %v265, 1
        %v267 = vadd.f32 %v265, %v266
        %v268 = vld [vmem:[%s240] sm:$0x3]
        %vm269 = vcmask 1040384
        %v270 = vsel %vm269, %v260, %v267
        %v271 = vadd.f32 %v268, %v270
        %272 = vst [vmem:[%s240] sm:$0x3] %v271
        %s273 = sand.u32 %s119, 1
        %s274 = scalar_lea.sflag [#allocation4], %s273
        %s275 = sand.u32 %s119, 1
        %s276 = smul.addr %s275, 2
        %s277 = scalar_lea.vmem [#allocation7], %s276
        // Predicated region
        $region41: #{tpu_custom_call.1} parent=27 // pred_check
          %p278 = pneg %p129
        $region42: #{tpu_custom_call.1} parent=27 // pred_check_branch
          %280 = sbr.rel (%p278) target = $region44
        $region43: #{tpu_custom_call.1} parent=27 // pred_region
          %s282 = ssub.s32 32, 32
          %283 = vsyncadd %s274, %s282
          %s284 = sadd.s32 %s28, %s27
          %s285 = smul.addr %s284, 32
          %s286 = scalar_lea.hbm %s2, %s285
          %s288 = sshll.u32 %s277, 4
          %s289 = int_to_ptr.vmem [resolvable:$true] %s288
          %291 = dma.vmem_to_hbm [thread:$0]  %s289, 32, %s286, %s274
        $region44: #{tpu_custom_call.1} parent=27 // pred_fallthru
          _
      $region28: #{tpu_custom_call.1} parent=5 // pred_fallthru
        _
      %p292 = scmp.le.s32.totalorder 2, %s17
      // Predicated region
      $region45: #{tpu_custom_call.1} parent=5 // pred_check
        %p293 = pneg %p292
      $region46: #{tpu_custom_call.1} parent=5 // pred_check_branch
        %295 = sbr.rel (%p293) target = $region48
      $region47: #{tpu_custom_call.1} parent=5 // pred_region
        %s296 = ssub.s32 %s17, 2
        // Predicated region
        $region49: #{tpu_custom_call.1} parent=47 // pred_check
          %p297 = pneg %p135
        $region50: #{tpu_custom_call.1} parent=47 // pred_check_branch
          %299 = sbr.rel (%p297) target = $region52
        $region51: #{tpu_custom_call.1} parent=47 // pred_region
          %s300 = sand.u32 %s120, 1
          %s301 = scalar_lea.sflag [#allocation4], %s300
          %s302 = sand.u32 %s120, 1
          %s303 = smul.addr %s302, 2
          %s304 = scalar_lea.vmem [#allocation7], %s303
          %305 = dma.done %s301, 32
        $region52: #{tpu_custom_call.1} parent=47 // pred_fallthru
          _
      $region48: #{tpu_custom_call.1} parent=5 // pred_fallthru
        _
    $region6: #{tpu_custom_call.1} parent=1 // loop_footer
      %s21 = sadd.s32 1, %s17
    $region7: #{tpu_custom_call.1} parent=1 // loop_footer_branch
      %16 = sbr.rel target = $region3
    $region8: #{tpu_custom_call.1} parent=1 // loop_exit
      _
    %306 = vsyncpa [#allocation3], 1
    %s307 = scalar_lea.sflag [#allocation3], 1
    %308 = vsyncpa %s307, 1
    %309 = vsyncpa [#allocation6], 1
    %s310 = scalar_lea.sflag [#allocation6], 1
    %311 = vsyncpa %s310, 1
    %312 = vsyncpa [#allocation4], 1
    %s313 = scalar_lea.sflag [#allocation4], 1
    %314 = vsyncpa %s313, 1

</llo_original>
